<compile_context>
chip_gen: v7x
topology: tpu7x:2x2x1
jax: 0.10.0
libtpu: 0.0.40
codegen_flags: <defaults>
</compile_context>

<pallas_src>
import functools

import jax
import jax.numpy as jnp
from jax import lax
from jax.experimental import pallas as pl
from jax.experimental.pallas import tpu as pltpu

LANES = 128
MAX_TILE_ROWS = 4096          # 2 MiB f32 per input block
VMEM_LIMIT_BYTES = 32 << 20
_LN2 = 0.6931471805599453


def _round_down(x, m):
    return (x // m) * m


def _num_tensorcores():
    """2-way core split only on v7x (2 TCs/chip); single-TC v5e/v6e -> 1."""
    try:
        kind = jax.devices()[0].device_kind.lower()
    except Exception:
        return 1
    return 2 if ("v7" in kind or "7x" in kind) else 1


def _logcosh_sum_plain(p, t):
    """Plain-JAX sum of log(cosh(p - t)) using the same stable identity."""
    err = p.astype(jnp.float32) - t.astype(jnp.float32)
    a = jnp.abs(err)
    return jnp.sum(a + jnp.log1p(jnp.exp(-2.0 * a)) - jnp.float32(_LN2))


def _logcosh_kernel(p_ref, t_ref, out_ref, *, tile_rows, tiles_per_core,
                    n_full_tiles, valid_rows, needs_mask):
    c = pl.program_id(0)   # core axis (CORE_PARALLEL on v7x; trivial otherwise)
    i = pl.program_id(1)   # reduction ("arbitrary") axis

    @pl.when(i == 0)
    def _init():
        out_ref[...] = jnp.zeros_like(out_ref)

    # log(cosh(x)) + ln2 = |x| + log1p(exp(-2|x|)).  The per-element "- ln2" is
    # folded once per tile into the (8,128) slab: each slot receives exactly
    # tile_rows//8 elements (masked elements contribute ln2 each -> net ~0).
    def _accumulate(err):
        a = jnp.abs(err)
        val = a + jnp.log1p(jnp.exp(-2.0 * a))
        folded = val.reshape(tile_rows // 8, 8, LANES).sum(axis=0)
        out_ref[0] += folded - jnp.float32((tile_rows // 8) * _LN2)

    err = p_ref[...].astype(jnp.float32) - t_ref[...].astype(jnp.float32)

    if not needs_mask:
        # No ragged/over-covered programs exist for this call: pure fast path.
        _accumulate(err)
    else:
        tile_idx = c * tiles_per_core + i

        @pl.when(tile_idx < n_full_tiles)
        def _full_tile():
            # Fast path: no iota / compare / select.
            _accumulate(err)

        @pl.when(tile_idx >= n_full_tiles)
        def _tail_tile():
            # Ragged last tile and/or clamped over-covered programs: zero out
            # rows past the real data (they then contribute exactly the ln2
            # baseline that the per-tile fold removes).
            row_ids = tile_idx * tile_rows + lax.broadcasted_iota(
                jnp.int32, (tile_rows, LANES), 0)
            _accumulate(jnp.where(row_ids < valid_rows, err, jnp.float32(0.0)))


def log_cosh_loss(predictions, targets, *, max_tile_rows=MAX_TILE_ROWS):
    assert predictions.shape == targets.shape, "shape mismatch"
    n_valid = predictions.size

    p_flat = predictions.reshape(-1)
    t_flat = targets.reshape(-1)

    rows = n_valid // LANES                # complete 128-lane rows
    itemsize = jnp.dtype(predictions.dtype).itemsize
    # Sublane packing: f32 -> 8, bf16 -> 16, int8/fp8 -> 32 rows per native tile.
    pack = max(8, (4 // max(1, itemsize)) * 8)

    total = jnp.float32(0.0)
    tail_start = 0

    if rows >= pack:
        n_bulk = rows * LANES
        tail_start = n_bulk

        # Aligned bulk for the kernel; NO jnp.pad copy.  When there is a ragged
        # tail, only a prefix slice is taken (the reshape itself is a bitcast).
        if n_bulk != n_valid:
            p_bulk = lax.slice(p_flat, (0,), (n_bulk,))
            t_bulk = lax.slice(t_flat, (0,), (n_bulk,))
        else:
            p_bulk, t_bulk = p_flat, t_flat
        p2d = p_bulk.reshape(rows, LANES)
        t2d = t_bulk.reshape(rows, LANES)

        # Largest tile (multiple of the packing) that fits the cap and the array.
        tile_rows = min(_round_down(max_tile_rows, pack), _round_down(rows, pack))
        n_tiles = pl.cdiv(rows, tile_rows)
        n_full_tiles = rows // tile_rows

        ncores = min(_num_tensorcores(), n_tiles)
        tiles_per_core = pl.cdiv(n_tiles, ncores)
        covered_rows = ncores * tiles_per_core * tile_rows
        needs_mask = (ncores * tiles_per_core) > n_full_tiles
        # Load-bearing invariant: any program whose rows extend past `rows`
        # (ragged last tile or clamped over-covered program) must be masked.
        assert covered_rows >= rows and (needs_mask or covered_rows == rows)

        def in_map(c, i):
            tile = c * tiles_per_core + i
            # Clamp over-coverage; those programs are fully masked in-kernel.
            return (jnp.minimum(tile, n_tiles - 1), 0)

        if ncores > 1:
            dims = (getattr(pltpu, "CORE_PARALLEL", "parallel"),
                    getattr(pltpu, "ARBITRARY", "arbitrary"))
        else:
            dims = ("arbitrary", "arbitrary")

        kernel = functools.partial(
            _logcosh_kernel,
            tile_rows=tile_rows,
            tiles_per_core=tiles_per_core,
            n_full_tiles=n_full_tiles,
            valid_rows=rows,
            needs_mask=needs_mask,
        )

        partials = pl.pallas_call(
            kernel,
            out_shape=jax.ShapeDtypeStruct((ncores, 8, LANES), jnp.float32),
            grid_spec=pltpu.PrefetchScalarGridSpec(
                num_scalar_prefetch=0,
                grid=(ncores, tiles_per_core),
                in_specs=[
                    pl.BlockSpec((tile_rows, LANES), in_map),
                    pl.BlockSpec((tile_rows, LANES), in_map),
                ],
                out_specs=pl.BlockSpec((1, 8, LANES), lambda c, i: (c, 0, 0)),
            ),
            compiler_params=pltpu.CompilerParams(
                dimension_semantics=dims,
                vmem_limit_bytes=VMEM_LIMIT_BYTES,
            ),
            cost_estimate=pl.CostEstimate(
                flops=6 * n_bulk,
                transcendentals=2 * n_bulk,
                bytes_accessed=2 * n_bulk * itemsize + ncores * 8 * LANES * 4,
            ),
        )(p2d, t2d)

        total = total + jnp.sum(partials)

    if tail_start < n_valid:
        # Ragged tail (< 128 elements) -- or a whole tiny input -- in plain JAX.
        tp = lax.slice(p_flat, (tail_start,), (n_valid,))
        tt = lax.slice(t_flat, (tail_start,), (n_valid,))
        total = total + _logcosh_sum_plain(tp, tt)

    return total / jnp.float32(n_valid)


if __name__ == "__main__":
    key = jax.random.PRNGKey(0)
    kp, kt = jax.random.split(key)

    # Small NCHW conv-style tensors consistent with the PyTorch module.
    shape = (2, 4, 16, 16)
    predictions = jax.random.normal(kp, shape, dtype=jnp.float32)
    targets = jax.random.normal(kt, shape, dtype=jnp.float32)

    loss = log_cosh_loss(predictions, targets)
    jax.block_until_ready(loss)

    ref = jnp.mean(jnp.log(jnp.cosh(predictions - targets)))
    assert jnp.allclose(loss, ref, rtol=1e-5, atol=1e-5), (loss, ref)

    # Exercise the ragged / masked path too (partial last tile + <128 tail).
    shape2 = (3, 5, 7, 11)   # 1155 elements: 9 full rows + 3-element tail
    p2 = jax.random.normal(kp, shape2, dtype=jnp.float32)
    t2 = jax.random.normal(kt, shape2, dtype=jnp.float32)
    loss2 = log_cosh_loss(p2, t2)
    jax.block_until_ready(loss2)
    ref2 = jnp.mean(jnp.log(jnp.cosh(p2 - t2)))
    assert jnp.allclose(loss2, ref2, rtol=1e-5, atol=1e-5), (loss2, ref2)

    print("KERNEL_OK")
</pallas_src>

<mosaic_0001>
module attributes {stable_mosaic.version = 11 : i64} {
  func.func @_logcosh_kernel(%arg0: i32, %arg1: i32, %arg2: memref<16x128xf32, #tpu.memory_space<vmem>>, %arg3: memref<16x128xf32, #tpu.memory_space<vmem>>, %arg4: memref<1x8x128xf32, #tpu.memory_space<vmem>>) attributes {dimension_semantics = [#tpu.dimension_semantics<arbitrary>, #tpu.dimension_semantics<arbitrary>], iteration_bounds = array<i64: 1, 1>, scalar_prefetch = 0 : i64, scratch_operands = 0 : i64, tpu.core_type = #tpu.core_type<tc>, window_params = [{transform_indices = @transform_0, window_bounds = array<i64: 16, 128>}, {transform_indices = @transform_1, window_bounds = array<i64: 16, 128>}, {transform_indices = @transform_2, window_bounds = array<i64: 1, 8, 128>}]} {
    %c0_i32 = arith.constant 0 : i32
    %0 = arith.cmpi eq, %arg1, %c0_i32 : i32
    %1 = arith.extui %0 : i1 to i32
    %c0_i32_0 = arith.constant 0 : i32
    %2 = arith.cmpi ne, %1, %c0_i32_0 : i32
    scf.if %2 {
      %cst_12 = arith.constant 0.000000e+00 : f32
      %22 = vector.broadcast %cst_12 : f32 to vector<1x8x128xf32>
      %c0_13 = arith.constant 0 : index
      %c0_14 = arith.constant 0 : index
      %c0_15 = arith.constant 0 : index
      %23 = vector.load %arg4[%c0_13, %c0_14, %c0_15] : memref<1x8x128xf32, #tpu.memory_space<vmem>>, vector<1x8x128xf32>
      tpu.vector_store %arg4[%c0_13, %c0_14, %c0_15], %22 {strides = array<i32>} : memref<1x8x128xf32, #tpu.memory_space<vmem>>, vector<1x8x128xf32>,
    } else {
    }
    %c0 = arith.constant 0 : index
    %c0_1 = arith.constant 0 : index
    %3 = vector.load %arg2[%c0, %c0_1] : memref<16x128xf32, #tpu.memory_space<vmem>>, vector<16x128xf32>
    %c0_2 = arith.constant 0 : index
    %c0_3 = arith.constant 0 : index
    %4 = vector.load %arg3[%c0_2, %c0_3] : memref<16x128xf32, #tpu.memory_space<vmem>>, vector<16x128xf32>
    %5 = arith.subf %3, %4 : vector<16x128xf32>
    %6 = math.absf %5 : vector<16x128xf32>
    %cst = arith.constant -2.000000e+00 : f32
    %7 = vector.broadcast %cst : f32 to vector<16x128xf32>
    %8 = arith.mulf %7, %6 : vector<16x128xf32>
    %9 = math.exp %8 : vector<16x128xf32>
    %10 = math.log1p %9 : vector<16x128xf32>
    %11 = arith.addf %6, %10 : vector<16x128xf32>
    %12 = vector.shape_cast %11 : vector<16x128xf32> to vector<2x8x128xf32>
    %cst_4 = arith.constant dense<0.000000e+00> : vector<8x128xf32>
    %13 = vector.multi_reduction <add>, %12, %cst_4 [0] : vector<2x8x128xf32> to vector<8x128xf32>
    %c0_5 = arith.constant 0 : index
    %c0_6 = arith.constant 0 : index
    %c0_7 = arith.constant 0 : index
    %14 = vector.load %arg4[%c0_5, %c0_6, %c0_7] : memref<1x8x128xf32, #tpu.memory_space<vmem>>, vector<1x8x128xf32>
    %15 = vector.shape_cast %14 : vector<1x8x128xf32> to vector<8x128xf32>
    %cst_8 = arith.constant 1.38629436 : f32
    %16 = vector.broadcast %cst_8 : f32 to vector<8x128xf32>
    %17 = arith.subf %13, %16 : vector<8x128xf32>
    %18 = arith.addf %15, %17 : vector<8x128xf32>
    %c0_9 = arith.constant 0 : index
    %c0_10 = arith.constant 0 : index
    %c0_11 = arith.constant 0 : index
    %19 = vector.load %arg4[%c0_9, %c0_10, %c0_11] : memref<1x8x128xf32, #tpu.memory_space<vmem>>, vector<1x8x128xf32>
    %20 = vector.shape_cast %19 : vector<1x8x128xf32> to vector<8x128xf32>
    %21 = vector.shape_cast %18 : vector<8x128xf32> to vector<1x8x128xf32>
    tpu.vector_store %arg4[%c0_9, %c0_10, %c0_11], %21 {strides = array<i32>} : memref<1x8x128xf32, #tpu.memory_space<vmem>>, vector<1x8x128xf32>,
    return
  }
  func.func @transform_0(%arg0: i32, %arg1: i32) -> (i32, i32) {
    %c1_i32 = arith.constant 1 : i32
    %0 = arith.muli %arg0, %c1_i32 : i32
    %1 = arith.addi %0, %arg1 : i32
    %c0_i32 = arith.constant 0 : i32
    %2 = arith.minsi %1, %c0_i32 : i32
    %c0_i32_0 = arith.constant 0 : i32
    %c0_i32_1 = arith.constant 0 : i32
    return %2, %c0_i32_0 : i32, i32
  }
  func.func @transform_1(%arg0: i32, %arg1: i32) -> (i32, i32) {
    %c1_i32 = arith.constant 1 : i32
    %0 = arith.muli %arg0, %c1_i32 : i32
    %1 = arith.addi %0, %arg1 : i32
    %c0_i32 = arith.constant 0 : i32
    %2 = arith.minsi %1, %c0_i32 : i32
    %c0_i32_0 = arith.constant 0 : i32
    %c0_i32_1 = arith.constant 0 : i32
    return %2, %c0_i32_0 : i32, i32
  }
  func.func @transform_2(%arg0: i32, %arg1: i32) -> (i32, i32, i32) {
    %c0_i32 = arith.constant 0 : i32
    %c0_i32_0 = arith.constant 0 : i32
    %c0_i32_1 = arith.constant 0 : i32
    return %arg0, %c0_i32, %c0_i32_0 : i32, i32, i32
  }
}

</mosaic_0001>

<llo_original>
// kernel: tpu_custom_call.1
$region0: #{tpu_custom_call.1}
  #allocation0 [shape = 'u32[]', space=smem, size = 0x4, offset = 0x4, fixed_abs, tag = 'smem constant byte address 0x4 - core index']
  #allocation1 [shape = 'u32[144,128]{1,0:T(1,128)}', space=vmem, size = 0x12000, scoped, tag = 'internal scratch']
  %s0 = inlined_call_operand.hbm [shape: f32[16,128], index: 0, kind: input, shape index: {}]
  %s1 = inlined_call_operand.hbm [shape: f32[16,128], index: 1, kind: input, shape index: {}]
  %s2 = inlined_call_operand.hbm [shape: f32[1,8,128], index: 2, kind: output, shape index: {}]
  %s3 = sld [smem:[#allocation0]]
  $region30: #{tpu_custom_call.1} parent=0
    _
  %s5 = ssub.s32 1, %s3
  %s6 = scalar_select 0, %s5, %s3
  $region1: #{tpu_custom_call.1} parent=0
    #allocation2 [shape = 'u8[8192]{0}', space=vmem, size = 0x2000, scoped, tag = 'input window, operand 0, single buffered']
    #allocation3 [shape = 's32[1]{0}', space=sflag, size = 0x4, scoped, tag = 'scoped memory for tpu_custom_call.1']
    #allocation4 [shape = 's32[1]{0}', space=sflag, size = 0x4, scoped, tag = 'scoped memory for tpu_custom_call.1']
    #allocation5 [shape = 'u8[8192]{0}', space=vmem, size = 0x2000, scoped, tag = 'input window, operand 1, single buffered']
    #allocation6 [shape = 's32[1]{0}', space=sflag, size = 0x4, scoped, tag = 'scoped memory for tpu_custom_call.1']
    #allocation7 [shape = 'u8[4096]{0}', space=vmem, size = 0x1000, scoped, tag = 'output window, operand 0, single buffered']
    %7 = vsyncpa [#allocation3], 0
    %8 = vsyncpa [#allocation6], 0
    %9 = vsyncpa [#allocation4], 0
    // Predicated region
    $region2: #{tpu_custom_call.1} parent=1 // pred_check
      _
    $region3: #{tpu_custom_call.1} parent=1 // pred_check_branch
      %11 = sbr.rel (0) target = $region5
    $region4: #{tpu_custom_call.1} parent=1 // pred_region
      %s12 = sadd.s32 0, 0
      %p13 = scmp.lt.s32.totalorder %s12, 0
      %s14 = scalar_select %p13, %s12, 0
      %s15 = smul.u32 2, %s14
      %s17 = ssub.s32 256, 256
      %18 = vsyncadd [#allocation3], %s17
      %s19 = smul.addr %s15, 128
      %s20 = scalar_lea.hbm %s0, %s19
      %s21 = sshll.u32 [#allocation2], 4
      %s22 = int_to_ptr.vmem [resolvable:$true] %s21
      %27 = dma.hbm_to_vmem [thread:$0]  %s20, 256, %s22, [#allocation3], 128, 128, 8
    $region5: #{tpu_custom_call.1} parent=1 // pred_fallthru
      _
    // Predicated region
    $region6: #{tpu_custom_call.1} parent=1 // pred_check
      _
    $region7: #{tpu_custom_call.1} parent=1 // pred_check_branch
      %29 = sbr.rel (0) target = $region9
    $region8: #{tpu_custom_call.1} parent=1 // pred_region
      %s30 = sadd.s32 0, 0
      %p31 = scmp.lt.s32.totalorder %s30, 0
      %s32 = scalar_select %p31, %s30, 0
      %s33 = smul.u32 2, %s32
      %s35 = ssub.s32 256, 256
      %36 = vsyncadd [#allocation6], %s35
      %s37 = smul.addr %s33, 128
      %s38 = scalar_lea.hbm %s1, %s37
      %s39 = sshll.u32 [#allocation5], 4
      %s40 = int_to_ptr.vmem [resolvable:$true] %s39
      %45 = dma.hbm_to_vmem [thread:$0]  %s38, 256, %s40, [#allocation6], 128, 128, 8
    $region9: #{tpu_custom_call.1} parent=1 // pred_fallthru
      _
    // Predicated region
    $region10: #{tpu_custom_call.1} parent=1 // pred_check
      _
    $region11: #{tpu_custom_call.1} parent=1 // pred_check_branch
      %47 = sbr.rel (0) target = $region13
    $region12: #{tpu_custom_call.1} parent=1 // pred_region
      %48 = dma.done [#allocation3], 256
    $region13: #{tpu_custom_call.1} parent=1 // pred_fallthru
      _
    // Predicated region
    $region14: #{tpu_custom_call.1} parent=1 // pred_check
      _
    $region15: #{tpu_custom_call.1} parent=1 // pred_check_branch
      %50 = sbr.rel (0) target = $region17
    $region16: #{tpu_custom_call.1} parent=1 // pred_region
      %51 = dma.done [#allocation6], 256
    $region17: #{tpu_custom_call.1} parent=1 // pred_fallthru
      _
    %s52 = sadd.s32 0, 0
    %p53 = scmp.lt.s32.totalorder %s52, 0
    %s54 = scalar_select %p53, %s52, 0
    %s55 = smul.u32 2, %s54
    %s56 = sadd.s32 0, 0
    %p57 = scmp.lt.s32.totalorder %s56, 0
    %s58 = scalar_select %p57, %s56, 0
    %s59 = smul.u32 2, %s58
    %p60 = scmp.eq.s32.totalorder 0, 0
    // Predicated region
    $region18: #{tpu_custom_call.1} parent=1 // pred_check
      %p61 = pneg %p60
    $region19: #{tpu_custom_call.1} parent=1 // pred_check_branch
      %63 = sbr.rel (%p61) target = $region21
    $region20: #{tpu_custom_call.1} parent=1 // pred_region
      %64 = vst [vmem:[#allocation7] sm:$0xff] 0.0
    $region21: #{tpu_custom_call.1} parent=1 // pred_fallthru
      _
    %v65 = vld [vmem:[#allocation2] sm:$0xff]
    %v66 = vld [vmem:[#allocation2 + $0x8] sm:$0xff]
    %v67 = vld [vmem:[#allocation5] sm:$0xff]
    %v68 = vld [vmem:[#allocation5 + $0x8] sm:$0xff]
    %v69 = vsub.f32 %v65, %v67
    %v70 = vsub.f32 %v66, %v68
    %v71 = vand.u32 2147483647, %v69
    %v72 = vand.u32 2147483647, %v70
    %v73 = vmul.f32 %v71, -2.0
    %v74 = vmul.f32 %v72, -2.0
    %v75 = vmul.f32 %v73, 1.442695
    %v76 = vpow.pop %v75
    %v77 = vmul.f32 %v74, 1.442695
    %v78 = vpow.pop %v77
    %v79 = vadd.f32 %v76, 1.0
    %v80 = vlog2.pop %v79
    %v81 = vmul.f32 %v80, 0.6931472
    %v82 = vmul.f32 -0.5, %v76
    %v83 = vadd.f32 %v82, 1.0
    %v84 = vmul.f32 %v83, %v76
    %v85 = vand.u32 2147483647, %v76
    %vm86 = vcmp.lt.f32.partialorder %v85, 0.0004427343
    %v87 = vsel %vm86, %v84, %v81
    %v88 = vadd.f32 %v78, 1.0
    %v89 = vlog2.pop %v88
    %v90 = vmul.f32 %v89, 0.6931472
    %v91 = vmul.f32 -0.5, %v78
    %v92 = vadd.f32 %v91, 1.0
    %v93 = vmul.f32 %v92, %v78
    %v94 = vand.u32 2147483647, %v78
    %vm95 = vcmp.lt.f32.partialorder %v94, 0.0004427343
    %v96 = vsel %vm95, %v93, %v90
    %v97 = vadd.f32 %v71, %v87
    %v98 = vadd.f32 %v72, %v96
    %v99 = vadd.f32 %v97, %v98
    %v100 = vld [vmem:[#allocation7] sm:$0xff]
    %v101 = vsub.f32 %v99, 1.3862944
    %v102 = vadd.f32 %v100, %v101
    %103 = vst [vmem:[#allocation7] sm:$0xff] %v102
    // Predicated region
    $region22: #{tpu_custom_call.1} parent=1 // pred_check
      _
    $region23: #{tpu_custom_call.1} parent=1 // pred_check_branch
      %105 = sbr.rel (0) target = $region25
    $region24: #{tpu_custom_call.1} parent=1 // pred_region
      %s107 = ssub.s32 128, 128
      %108 = vsyncadd [#allocation4], %s107
      %s110 = sshll.u32 [#allocation7], 4
      %s111 = int_to_ptr.vmem [resolvable:$true] %s110
      %113 = dma.vmem_to_hbm [thread:$0]  %s111, 128, %s2, [#allocation4]
    $region25: #{tpu_custom_call.1} parent=1 // pred_fallthru
      _
    // Predicated region
    $region26: #{tpu_custom_call.1} parent=1 // pred_check
      _
    $region27: #{tpu_custom_call.1} parent=1 // pred_check_branch
      %115 = sbr.rel (0) target = $region29
    $region28: #{tpu_custom_call.1} parent=1 // pred_region
      %116 = dma.done [#allocation4], 128
    $region29: #{tpu_custom_call.1} parent=1 // pred_fallthru
      _
    %117 = vsyncpa [#allocation3], 1
    %118 = vsyncpa [#allocation6], 1
    %119 = vsyncpa [#allocation4], 1

</llo_original>
